<compile_context>
chip_gen: v6e
topology: v6e:2x2x1
jax: 0.10.0
libtpu: 0.0.40
codegen_flags: <defaults>
</compile_context>

<pallas_src>
import functools

import jax
import jax.numpy as jnp
from jax.experimental import pallas as pl
from jax.experimental.pallas import tpu as pltpu


def _round_up(x, m):
    return (x + m - 1) // m * m


def sgc_hop_kernel(norm_dst_ref, norm_src_ref, adj_ref, feat_ref, out_ref, acc_ref):
    """One tile step of out = norm_dst * (A @ (norm_src * feat)).

    norm_dst_ref : (tm, 1) f32    dst-node normalization (degs^-0.5)
    norm_src_ref : (tk, 1) f32    src-node normalization (degs^-0.5)
    adj_ref      : (tm, tk) bf16  dense aggregation tile, adj[dst, src] in {0,1}
    feat_ref     : (tk, tn) f32   source-node feature tile
    out_ref      : (tm, tn) f32   destination-node feature tile
    acc_ref      : (tm, tn) f32   VMEM accumulator (resident across src axis)
    """
    s = pl.program_id(2)

    @pl.when(s == 0)
    def _():
        acc_ref[...] = jnp.zeros_like(acc_ref)

    # bf16 0/1 -> f32 is exact; scale src features by src norm, MXU-accumulate.
    adj_tile = adj_ref[...].astype(jnp.float32)
    feat_tile = feat_ref[...] * norm_src_ref[...]
    acc_ref[...] += jnp.dot(adj_tile, feat_tile,
                            preferred_element_type=jnp.float32)

    @pl.when(s == pl.num_programs(2) - 1)
    def _():
        out_ref[...] = (acc_ref[...] * norm_dst_ref[...]).astype(out_ref.dtype)


def sgc_agg(adj, feat, *, k=1, tm=128, tn=128, tk=128):
    """SGC aggregation: (D^-1/2 A D^-1/2)^k @ feat.

    adj  : (N, N) dense aggregation matrix, adj[dst, src] = 1 iff edge src->dst
    feat : (N, D) node features
    """
    N, D = feat.shape
    assert adj.shape == (N, N)

    # Degree / normalization once, outside the kernel (matches the module:
    # in-degrees = row sums of adj, clamp(min=1), ^-0.5).
    adj_f32 = adj.astype(jnp.float32)
    degs = jnp.maximum(jnp.sum(adj_f32, axis=1, keepdims=True), 1.0)
    norm = jax.lax.rsqrt(degs)                                   # (N, 1) f32

    # Pad: node axis to a tile multiple, feature axis to a lane-dense multiple
    # of 128. Padded adj rows/cols are zero, padded feat is zero, padded norm
    # is 1 -> the valid [:N, :D] region is unaffected.
    Np = _round_up(N, max(tm, tk))
    Dp = _round_up(D, tn)

    adj_p = jnp.zeros((Np, Np), jnp.bfloat16).at[:N, :N].set(
        adj_f32.astype(jnp.bfloat16))
    feat_p = jnp.zeros((Np, Dp), jnp.float32).at[:N, :D].set(
        feat.astype(jnp.float32))
    norm_p = jnp.ones((Np, 1), jnp.float32).at[:N, :].set(norm)

    grid = (Np // tm, Dp // tn, Np // tk)

    cost = pl.CostEstimate(
        flops=2 * Np * Np * Dp,
        transcendentals=0,
        bytes_accessed=Np * Np * 2 + 2 * Np * Dp * 4 + 2 * Np * 4,
    )

    hop = pl.pallas_call(
        sgc_hop_kernel,
        out_shape=jax.ShapeDtypeStruct((Np, Dp), jnp.float32),
        grid_spec=pltpu.PrefetchScalarGridSpec(
            num_scalar_prefetch=0,
            grid=grid,
            in_specs=[
                pl.BlockSpec((tm, 1), lambda i, j, s: (i, 0)),    # norm_dst
                pl.BlockSpec((tk, 1), lambda i, j, s: (s, 0)),    # norm_src
                pl.BlockSpec((tm, tk), lambda i, j, s: (i, s)),   # adj tile
                pl.BlockSpec((tk, tn), lambda i, j, s: (s, j)),   # feat tile
            ],
            out_specs=pl.BlockSpec((tm, tn), lambda i, j, s: (i, j)),
            scratch_shapes=[pltpu.VMEM((tm, tn), jnp.float32)],
        ),
        compiler_params=pltpu.CompilerParams(
            dimension_semantics=("parallel", "parallel", "arbitrary"),
            vmem_limit_bytes=64 * 1024 * 1024,
        ),
        cost_estimate=cost,
    )

    h = feat_p
    for _ in range(k):
        h = hop(norm_p, norm_p, adj_p, h)
    return h[:N, :D].astype(feat.dtype)


def sgc_agg_reference(adj, feat, *, k=1):
    """Pure-JAX reference mirroring the DGL/PyTorch forward()."""
    degs = jnp.maximum(jnp.sum(adj.astype(jnp.float32), axis=1, keepdims=True), 1.0)
    norm = jax.lax.rsqrt(degs)
    h = feat.astype(jnp.float32)
    for _ in range(k):
        h = h * norm
        h = adj.astype(jnp.float32) @ h
        h = h * norm
    return h.astype(feat.dtype)


if __name__ == "__main__":
    key = jax.random.PRNGKey(0)
    k_adj, k_feat = jax.random.split(key)

    # Small graph: 200 nodes, 48-dim features, k=2 hops (exercises padding
    # to 256x128 and a 2x1x2 grid).
    N, D, K = 200, 48, 2

    # Deterministic sparse-ish directed graph + self-loops (self-loops
    # guarantee no 0-in-degree nodes, matching the DGL check).
    adj = jax.random.bernoulli(k_adj, p=0.05, shape=(N, N)).astype(jnp.float32)
    adj = jnp.maximum(adj, jnp.eye(N, dtype=jnp.float32))

    feat = jax.random.normal(k_feat, (N, D), dtype=jnp.float32)

    out = sgc_agg(adj, feat, k=K)
    out = jax.block_until_ready(out)

    ref = sgc_agg_reference(adj, feat, k=K)
    assert out.shape == (N, D)
    assert jnp.allclose(out, ref, atol=1e-4, rtol=1e-4), "mismatch vs reference"

    print("KERNEL_OK")
</pallas_src>

<mosaic_0001>
module attributes {stable_mosaic.version = 11 : i64} {
  func.func @sgc_hop_kernel(%arg0: i32, %arg1: i32, %arg2: i32, %arg3: memref<128x1xf32, #tpu.memory_space<vmem>>, %arg4: memref<128x1xf32, #tpu.memory_space<vmem>>, %arg5: memref<128x128xbf16, #tpu.memory_space<vmem>>, %arg6: memref<128x128xf32, #tpu.memory_space<vmem>>, %arg7: memref<128x128xf32, #tpu.memory_space<vmem>>, %arg8: memref<128x128xf32, #tpu.memory_space<vmem>>) attributes {dimension_semantics = [#tpu.dimension_semantics<parallel>, #tpu.dimension_semantics<parallel>, #tpu.dimension_semantics<arbitrary>], iteration_bounds = array<i64: 2, 1, 2>, scalar_prefetch = 0 : i64, scratch_operands = 1 : i64, tpu.core_type = #tpu.core_type<tc>, window_params = [{transform_indices = @transform_0, window_bounds = array<i64: 128, 1>}, {transform_indices = @transform_1, window_bounds = array<i64: 128, 1>}, {transform_indices = @transform_2, window_bounds = array<i64: 128, 128>}, {transform_indices = @transform_3, window_bounds = array<i64: 128, 128>}, {transform_indices = @transform_4, window_bounds = array<i64: 128, 128>}]} {
    %c0_i32 = arith.constant 0 : i32
    %0 = arith.cmpi eq, %arg2, %c0_i32 : i32
    %1 = arith.extui %0 : i1 to i32
    %c0_i32_0 = arith.constant 0 : i32
    %2 = arith.cmpi ne, %1, %c0_i32_0 : i32
    scf.if %2 {
      %cst_11 = arith.constant 0.000000e+00 : f32
      %16 = vector.broadcast %cst_11 : f32 to vector<128x128xf32>
      %c0_12 = arith.constant 0 : index
      %c0_13 = arith.constant 0 : index
      %17 = vector.load %arg8[%c0_12, %c0_13] : memref<128x128xf32, #tpu.memory_space<vmem>>, vector<128x128xf32>
      tpu.vector_store %arg8[%c0_12, %c0_13], %16 {strides = array<i32>} : memref<128x128xf32, #tpu.memory_space<vmem>>, vector<128x128xf32>,
    } else {
    }
    %c0 = arith.constant 0 : index
    %c0_1 = arith.constant 0 : index
    %3 = vector.load %arg5[%c0, %c0_1] : memref<128x128xbf16, #tpu.memory_space<vmem>>, vector<128x128xbf16>
    %4 = arith.extf %3 : vector<128x128xbf16> to vector<128x128xf32>
    %c0_2 = arith.constant 0 : index
    %c0_3 = arith.constant 0 : index
    %5 = vector.load %arg6[%c0_2, %c0_3] : memref<128x128xf32, #tpu.memory_space<vmem>>, vector<128x128xf32>
    %c0_4 = arith.constant 0 : index
    %c0_5 = arith.constant 0 : index
    %6 = vector.load %arg4[%c0_4, %c0_5] : memref<128x1xf32, #tpu.memory_space<vmem>>, vector<128x1xf32>
    %7 = vector.broadcast %6 : vector<128x1xf32> to vector<128x128xf32>
    %8 = arith.mulf %5, %7 : vector<128x128xf32>
    %c0_6 = arith.constant 0 : index
    %c0_7 = arith.constant 0 : index
    %9 = vector.load %arg8[%c0_6, %c0_7] : memref<128x128xf32, #tpu.memory_space<vmem>>, vector<128x128xf32>
    %cst = arith.constant dense<0.000000e+00> : vector<128x128xf32>
    %10 = tpu.matmul %4, %8, %cst {dimension_numbers = #tpu.dot_dimension_numbers<[1], [0], [0], [1], [0, 0, 1, 1], [], []>} : vector<128x128xf32>, vector<128x128xf32>, vector<128x128xf32> -> vector<128x128xf32>
    %11 = arith.addf %9, %10 : vector<128x128xf32>
    %c0_8 = arith.constant 0 : index
    %c0_9 = arith.constant 0 : index
    %12 = vector.load %arg8[%c0_8, %c0_9] : memref<128x128xf32, #tpu.memory_space<vmem>>, vector<128x128xf32>
    tpu.vector_store %arg8[%c0_8, %c0_9], %11 {strides = array<i32>} : memref<128x128xf32, #tpu.memory_space<vmem>>, vector<128x128xf32>,
    %c1_i32 = arith.constant 1 : i32
    %13 = arith.cmpi eq, %arg2, %c1_i32 : i32
    %14 = arith.extui %13 : i1 to i32
    %c0_i32_10 = arith.constant 0 : i32
    %15 = arith.cmpi ne, %14, %c0_i32_10 : i32
    scf.if %15 {
      %c0_11 = arith.constant 0 : index
      %c0_12 = arith.constant 0 : index
      %16 = vector.load %arg8[%c0_11, %c0_12] : memref<128x128xf32, #tpu.memory_space<vmem>>, vector<128x128xf32>
      %c0_13 = arith.constant 0 : index
      %c0_14 = arith.constant 0 : index
      %17 = vector.load %arg3[%c0_13, %c0_14] : memref<128x1xf32, #tpu.memory_space<vmem>>, vector<128x1xf32>
      %18 = vector.broadcast %17 : vector<128x1xf32> to vector<128x128xf32>
      %19 = arith.mulf %16, %18 : vector<128x128xf32>
      %c0_15 = arith.constant 0 : index
      %c0_16 = arith.constant 0 : index
      %20 = vector.load %arg7[%c0_15, %c0_16] : memref<128x128xf32, #tpu.memory_space<vmem>>, vector<128x128xf32>
      tpu.vector_store %arg7[%c0_15, %c0_16], %19 {strides = array<i32>} : memref<128x128xf32, #tpu.memory_space<vmem>>, vector<128x128xf32>,
    } else {
    }
    return
  }
  func.func @transform_0(%arg0: i32, %arg1: i32, %arg2: i32) -> (i32, i32) {
    %c0_i32 = arith.constant 0 : i32
    %c0_i32_0 = arith.constant 0 : i32
    return %arg0, %c0_i32 : i32, i32
  }
  func.func @transform_1(%arg0: i32, %arg1: i32, %arg2: i32) -> (i32, i32) {
    %c0_i32 = arith.constant 0 : i32
    %c0_i32_0 = arith.constant 0 : i32
    return %arg2, %c0_i32 : i32, i32
  }
  func.func @transform_2(%arg0: i32, %arg1: i32, %arg2: i32) -> (i32, i32) {
    %c0_i32 = arith.constant 0 : i32
    return %arg0, %arg2 : i32, i32
  }
  func.func @transform_3(%arg0: i32, %arg1: i32, %arg2: i32) -> (i32, i32) {
    %c0_i32 = arith.constant 0 : i32
    return %arg2, %arg1 : i32, i32
  }
  func.func @transform_4(%arg0: i32, %arg1: i32, %arg2: i32) -> (i32, i32) {
    %c0_i32 = arith.constant 0 : i32
    return %arg0, %arg1 : i32, i32
  }
}

</mosaic_0001>

<llo_original>
// kernel: tpu_custom_call.1
$region0: #{tpu_custom_call.1}
  #allocation0 [shape = 'u32[]', space=smem, size = 0x4, offset = 0x4, fixed_abs, tag = 'smem constant byte address 0x4 - core index']
  #allocation1 [shape = 'u32[144,128]{1,0:T(1,128)}', space=vmem, size = 0x12000, scoped, tag = 'internal scratch']
  #allocation2 [shape = 'f32[128,128]{1,0:T(8,128)}', space=vmem, size = 0x10000, scoped, tag = 'scratch operand']
  %s0 = inlined_call_operand.vmem [shape: f32[256,1], index: 0, kind: input, shape index: {}]
  %s1 = inlined_call_operand.vmem [shape: f32[256,1], index: 1, kind: input, shape index: {}]
  %s2 = inlined_call_operand.vmem [shape: bf16[256,256], index: 2, kind: input, shape index: {}]
  %s3 = inlined_call_operand.vmem [shape: f32[256,128], index: 3, kind: input, shape index: {}]
  %s4 = inlined_call_operand.hbm [shape: f32[256,128], index: 4, kind: output, shape index: {}]
  %s5 = sld [smem:[#allocation0]]
  $region98: #{tpu_custom_call.1} parent=0
    _
  %s7 = ssub.s32 1, %s5
  %s8 = scalar_select 0, %s7, %s5
  $region1: #{tpu_custom_call.1} parent=0
    #allocation3 [shape = 'u8[65536]{0}', space=vmem, size = 0x10000, scoped, tag = 'input window, operand 2']
    #allocation4 [shape = 'u8[131072]{0}', space=vmem, size = 0x20000, scoped, tag = 'output window, operand 0']
    #allocation5 [shape = 's32[2]{0}', space=sflag, size = 0x8, scoped, tag = 'scoped memory for tpu_custom_call.1']
    %9 = vsyncpa [#allocation5], 0
    %s10 = scalar_lea.sflag [#allocation5], 1
    %11 = vsyncpa %s10, 0
    loop: start=0, step=1, limit=6
    $region2: #{tpu_custom_call.1} parent=1 // loop_pre_header
      _
    $region3: #{tpu_custom_call.1} parent=1 // loop_header
      %s13 = sphi 0, %s17
      %p14 = scmp.ge.s32.totalorder %s13, 6
      %s20 = sphi 0, %s39
      %s21 = sphi 0, %s35
      %s22 = sphi 0, %s31
      %s23 = sphi 0, %s20
      %s24 = sphi 0, %s21
      %s25 = sphi 0, %s22
      %s26 = sphi 0, %s23
      %s27 = sphi 0, %s24
      %s28 = sphi 0, %s25
      %s42 = sphi 0, %s44
      %s45 = sphi 0, %s42
      %s46 = sphi 0, %s45
      %s62 = sphi 0, %s46
      %s68 = sphi 0, %s70
      %s71 = sphi 0, %s68
      %s72 = sphi 0, %s71
      %s88 = sphi 0, %s72
      %s96 = sphi 0, %s98
      %s99 = sphi 0, %s96
      %s100 = sphi 0, %s99
      %s116 = sphi 0, %s100
      %s124 = sphi 0, %s126
      %s127 = sphi 0, %s124
      %s128 = sphi 0, %s127
      %s144 = sphi 0, %s128
      %s152 = sphi 0, %s154
      %s155 = sphi 0, %s152
      %s156 = sphi 0, %s155
      %s172 = sphi 0, %s156
    $region4: #{tpu_custom_call.1} parent=1 // loop_header_branch
      %16 = sbr.rel (%p14) target = $region8
    $region5: #{tpu_custom_call.1} parent=1 // loop_body
      %s18 = ssub.s32 %s13, 1
      %s19 = ssub.s32 %s13, 2
      %s29 = sadd.s32 1, %s22
      %p30 = scmp.ge.s32.totalorder %s29, 2
      %s31 = scalar_select %p30, 0, %s29
      %s32 = sadd.s32 1, %s21
      %s33 = scalar_select %p30, %s32, %s21
      %p34 = scmp.ge.s32.totalorder %s33, 1
      %s35 = scalar_select %p34, 0, %s33
      %s36 = sadd.s32 1, %s20
      %s37 = scalar_select %p34, %s36, %s20
      %p38 = scmp.ge.s32.totalorder %s37, 2
      %s39 = scalar_select %p38, 0, %s37
      %s40 = ssub.s32 %s20, %s39
      %p41 = scmp.eq.s32.totalorder %s40, 0
      %s43 = sadd.s32 %s42, 1
      %s44 = scalar_select %p41, %s42, %s43
      %p47 = pneg %p41
      %p48 = scmp.eq.s32.totalorder %s13, 3
      %p49 = por %p47, %p48
      %p50 = scmp.ne.s32.totalorder %s42, %s45
      %p51 = scmp.eq.s32.totalorder %s13, 0
      %p52 = por %p50, %p51
      %p53 = scmp.ne.s32.totalorder %s42, %s45
      %p54 = scmp.eq.s32.totalorder %s18, 3
      %p55 = por %p53, %p54
      %p56 = scmp.ne.s32.totalorder %s45, %s46
      %p57 = scmp.eq.s32.totalorder %s18, 0
      %p58 = por %p56, %p57
      %p59 = scmp.ne.s32.totalorder %s45, %s46
      %p60 = scmp.eq.s32.totalorder %s19, 3
      %p61 = por %p59, %p60
      %p63 = scmp.ne.s32.totalorder %s46, %s62
      %p64 = scmp.eq.s32.totalorder %s19, 0
      %p65 = por %p63, %p64
      %s66 = ssub.s32 %s22, %s31
      %p67 = scmp.eq.s32.totalorder %s66, 0
      %s69 = sadd.s32 %s68, 1
      %s70 = scalar_select %p67, %s68, %s69
      %p73 = pneg %p67
      %p74 = scmp.eq.s32.totalorder %s13, 3
      %p75 = por %p73, %p74
      %p76 = scmp.ne.s32.totalorder %s68, %s71
      %p77 = scmp.eq.s32.totalorder %s13, 0
      %p78 = por %p76, %p77
      %p79 = scmp.ne.s32.totalorder %s68, %s71
      %p80 = scmp.eq.s32.totalorder %s18, 3
      %p81 = por %p79, %p80
      %p82 = scmp.ne.s32.totalorder %s71, %s72
      %p83 = scmp.eq.s32.totalorder %s18, 0
      %p84 = por %p82, %p83
      %p85 = scmp.ne.s32.totalorder %s71, %s72
      %p86 = scmp.eq.s32.totalorder %s19, 3
      %p87 = por %p85, %p86
      %p89 = scmp.ne.s32.totalorder %s72, %s88
      %p90 = scmp.eq.s32.totalorder %s19, 0
      %p91 = por %p89, %p90
      %s92 = ssub.s32 %s20, %s39
      %s93 = ssub.s32 %s22, %s31
      %s94 = sor.u32 %s92, %s93
      %p95 = scmp.eq.s32.totalorder %s94, 0
      %s97 = sadd.s32 %s96, 1
      %s98 = scalar_select %p95, %s96, %s97
      %p101 = pneg %p95
      %p102 = scmp.eq.s32.totalorder %s13, 3
      %p103 = por %p101, %p102
      %p104 = scmp.ne.s32.totalorder %s96, %s99
      %p105 = scmp.eq.s32.totalorder %s13, 0
      %p106 = por %p104, %p105
      %p107 = scmp.ne.s32.totalorder %s96, %s99
      %p108 = scmp.eq.s32.totalorder %s18, 3
      %p109 = por %p107, %p108
      %p110 = scmp.ne.s32.totalorder %s99, %s100
      %p111 = scmp.eq.s32.totalorder %s18, 0
      %p112 = por %p110, %p111
      %p113 = scmp.ne.s32.totalorder %s99, %s100
      %p114 = scmp.eq.s32.totalorder %s19, 3
      %p115 = por %p113, %p114
      %p117 = scmp.ne.s32.totalorder %s100, %s116
      %p118 = scmp.eq.s32.totalorder %s19, 0
      %p119 = por %p117, %p118
      %s120 = ssub.s32 %s22, %s31
      %s121 = ssub.s32 %s21, %s35
      %s122 = sor.u32 %s120, %s121
      %p123 = scmp.eq.s32.totalorder %s122, 0
      %s125 = sadd.s32 %s124, 1
      %s126 = scalar_select %p123, %s124, %s125
      %p129 = pneg %p123
      %p130 = scmp.eq.s32.totalorder %s13, 3
      %p131 = por %p129, %p130
      %p132 = scmp.ne.s32.totalorder %s124, %s127
      %p133 = scmp.eq.s32.totalorder %s13, 0
      %p134 = por %p132, %p133
      %p135 = scmp.ne.s32.totalorder %s124, %s127
      %p136 = scmp.eq.s32.totalorder %s18, 3
      %p137 = por %p135, %p136
      %p138 = scmp.ne.s32.totalorder %s127, %s128
      %p139 = scmp.eq.s32.totalorder %s18, 0
      %p140 = por %p138, %p139
      %p141 = scmp.ne.s32.totalorder %s127, %s128
      %p142 = scmp.eq.s32.totalorder %s19, 3
      %p143 = por %p141, %p142
      %p145 = scmp.ne.s32.totalorder %s128, %s144
      %p146 = scmp.eq.s32.totalorder %s19, 0
      %p147 = por %p145, %p146
      %s148 = ssub.s32 %s20, %s39
      %s149 = ssub.s32 %s21, %s35
      %s150 = sor.u32 %s148, %s149
      %p151 = scmp.eq.s32.totalorder %s150, 0
      %s153 = sadd.s32 %s152, 1
      %s154 = scalar_select %p151, %s152, %s153
      %p157 = pneg %p151
      %p158 = scmp.eq.s32.totalorder %s13, 3
      %p159 = por %p157, %p158
      %p160 = scmp.ne.s32.totalorder %s152, %s155
      %p161 = scmp.eq.s32.totalorder %s13, 0
      %p162 = por %p160, %p161
      %p163 = scmp.ne.s32.totalorder %s152, %s155
      %p164 = scmp.eq.s32.totalorder %s18, 3
      %p165 = por %p163, %p164
      %p166 = scmp.ne.s32.totalorder %s155, %s156
      %p167 = scmp.eq.s32.totalorder %s18, 0
      %p168 = por %p166, %p167
      %p169 = scmp.ne.s32.totalorder %s155, %s156
      %p170 = scmp.eq.s32.totalorder %s19, 3
      %p171 = por %p169, %p170
      %p173 = scmp.ne.s32.totalorder %s156, %s172
      %p174 = scmp.eq.s32.totalorder %s19, 0
      %p175 = por %p173, %p174
      %p176 = scmp.le.s32.totalorder 1, %s13
      %p177 = scmp.lt.s32.totalorder %s13, 5
      %p178 = pnand %p176, %p177
      %p179 = pneg %p178
      // Predicated region
      $region9: #{tpu_custom_call.1} parent=5 // pred_check
        _
      $region10: #{tpu_custom_call.1} parent=5 // pred_check_branch
        %181 = sbr.rel (%p178) target = $region12
      $region11: #{tpu_custom_call.1} parent=5 // pred_region
        %s182 = ssub.s32 %s13, 1
      $region12: #{tpu_custom_call.1} parent=5 // pred_fallthru
        _
      %p183 = scmp.lt.s32.totalorder %s13, 4
      // Predicated region
      $region13: #{tpu_custom_call.1} parent=5 // pred_check
        %p184 = pneg %p183
      $region14: #{tpu_custom_call.1} parent=5 // pred_check_branch
        %186 = sbr.rel (%p184) target = $region16
      $region15: #{tpu_custom_call.1} parent=5 // pred_region
        // Predicated region
        $region17: #{tpu_custom_call.1} parent=15 // pred_check
          %p187 = pneg %p52
        $region18: #{tpu_custom_call.1} parent=15 // pred_check_branch
          %189 = sbr.rel (%p187) target = $region20
        $region19: #{tpu_custom_call.1} parent=15 // pred_region
          %s190 = smul.u32 16, %s20
          %p191 = scmp.lt.s32.totalorder %s190, 31
          %s192 = scalar_select %p191, %s190, 31
          %s193 = smul.addr %s192, 8
          %s194 = scalar_lea.vmem %s0, %s193
          %s195 = smul.u32 16, %s20
        $region20: #{tpu_custom_call.1} parent=15 // pred_fallthru
          _
        // Predicated region
        $region21: #{tpu_custom_call.1} parent=15 // pred_check
          %p196 = pneg %p78
        $region22: #{tpu_custom_call.1} parent=15 // pred_check_branch
          %198 = sbr.rel (%p196) target = $region24
        $region23: #{tpu_custom_call.1} parent=15 // pred_region
          %s199 = smul.u32 16, %s22
          %p200 = scmp.lt.s32.totalorder %s199, 31
          %s201 = scalar_select %p200, %s199, 31
          %s202 = smul.addr %s201, 8
          %s203 = scalar_lea.vmem %s1, %s202
          %s204 = smul.u32 16, %s22
        $region24: #{tpu_custom_call.1} parent=15 // pred_fallthru
          _
        // Predicated region
        $region25: #{tpu_custom_call.1} parent=15 // pred_check
          %p205 = pneg %p106
        $region26: #{tpu_custom_call.1} parent=15 // pred_check_branch
          %207 = sbr.rel (%p205) target = $region28
        $region27: #{tpu_custom_call.1} parent=15 // pred_region
          %s208 = sand.u32 %s96, 1
          %s209 = sand.u32 %s96, 1
          %s210 = smul.addr %s209, 64
          %s211 = scalar_lea.vmem [#allocation3], %s210
          %s212 = smul.u32 16, %s20
          %s213 = smul.addr %s212, 2
          %s214 = sadd.s32 %s22, %s213
          %s215 = smul.addr %s214, 4
          %s216 = scalar_lea.vmem %s2, %s215
          // Predicated region
          $region29: #{tpu_custom_call.1} parent=27 // pred_check
            _
          $region30: #{tpu_custom_call.1} parent=27 // pred_check_branch
            %218 = sbr.rel (0) target = $region32
          $region31: #{tpu_custom_call.1} parent=27 // pred_region
            // Predicated region
            $region33: #{tpu_custom_call.1} parent=31 // pred_check
              _
            $region34: #{tpu_custom_call.1} parent=31 // pred_check_branch
              %220 = sbr.rel target = $region36
            $region35: #{tpu_custom_call.1} parent=31 // pred_region
              // Predicated region
              $region48: #{tpu_custom_call.1} parent=35 // pred_check
                _
              $region49: #{tpu_custom_call.1} parent=35 // pred_check_branch
                %266 = sbr.rel (0) target = $region51
              $region50: #{tpu_custom_call.1} parent=35 // pred_region
                loop: start=0, step=1, limit=1
                $region52: #{tpu_custom_call.1} parent=50 // loop_pre_header
                  _
                $region53: #{tpu_custom_call.1} parent=50 // loop_header
                  %s268 = sphi 0, %s272
                  %p269 = scmp.ge.s32.totalorder %s268, 1
                  %s273 = sphi %s216, %s216
                  %s274 = sphi %s211, %s211
                $region54: #{tpu_custom_call.1} parent=50 // loop_header_branch
                  %271 = sbr.rel (%p269) target = $region58
                $region55: #{tpu_custom_call.1} parent=50 // loop_body
                  _
                $region56: #{tpu_custom_call.1} parent=50 // loop_footer
                  %s272 = sadd.s32 1, %s268
                $region57: #{tpu_custom_call.1} parent=50 // loop_footer_branch
                  %267 = sbr.rel target = $region53
                $region58: #{tpu_custom_call.1} parent=50 // loop_exit
                  _
                %s276 = ssub.s32 16, 1
                loop: start=0, step=1, limit=1
                $region59: #{tpu_custom_call.1} parent=50 // loop_pre_header
                  _
                $region60: #{tpu_custom_call.1} parent=50 // loop_header
                  %s278 = sphi 0, %s282
                  %p279 = scmp.ge.s32.totalorder %s278, 1
                  %s283 = sphi %s216, %s216
                  %s284 = sphi %s211, %s211
                $region61: #{tpu_custom_call.1} parent=50 // loop_header_branch
                  %281 = sbr.rel (%p279) target = $region65
                $region62: #{tpu_custom_call.1} parent=50 // loop_body
                  %v285 = vld [vmem:[%s283] sm:%s276]
                  %286 = vst [vmem:[%s284] sm:%s276] %v285
                  %v287 = vld [vmem:[%s283 + $0x8] sm:%s276]
                  %288 = vst [vmem:[%s284 + $0x4] sm:%s276] %v287
                  %v289 = vld [vmem:[%s283 + $0x10] sm:%s276]
                  %290 = vst [vmem:[%s284 + $0x8] sm:%s276] %v289
                  %v291 = vld [vmem:[%s283 + $0x18] sm:%s276]
                  %292 = vst [vmem:[%s284 + $0xc] sm:%s276] %v291
                  %v293 = vld [vmem:[%s283 + $0x20] sm:%s276]
                  %294 = vst [vmem:[%s284 + $0x10] sm:%s276] %v293
                  %v295 = vld [vmem:[%s283 + $0x28] sm:%s276]
                  %296 = vst [vmem:[%s284 + $0x14] sm:%s276] %v295
                  %v297 = vld [vmem:[%s283 + $0x30] sm:%s276]
                  %298 = vst [vmem:[%s284 + $0x18] sm:%s276] %v297
                  %v299 = vld [vmem:[%s283 + $0x38] sm:%s276]
                  %300 = vst [vmem:[%s284 + $0x1c] sm:%s276] %v299
                  %v301 = vld [vmem:[%s283 + $0x40] sm:%s276]
                  %302 = vst [vmem:[%s284 + $0x20] sm:%s276] %v301
                  %v303 = vld [vmem:[%s283 + $0x48] sm:%s276]
                  %304 = vst [vmem:[%s284 + $0x24] sm:%s276] %v303
                  %v305 = vld [vmem:[%s283 + $0x50] sm:%s276]
                  %306 = vst [vmem:[%s284 + $0x28] sm:%s276] %v305
                  %v307 = vld [vmem:[%s283 + $0x58] sm:%s276]
                  %308 = vst [vmem:[%s284 + $0x2c] sm:%s276] %v307
                  %v309 = vld [vmem:[%s283 + $0x60] sm:%s276]
                  %310 = vst [vmem:[%s284 + $0x30] sm:%s276] %v309
                  %v311 = vld [vmem:[%s283 + $0x68] sm:%s276]
                  %312 = vst [vmem:[%s284 + $0x34] sm:%s276] %v311
                  %v313 = vld [vmem:[%s283 + $0x70] sm:%s276]
                  %314 = vst [vmem:[%s284 + $0x38] sm:%s276] %v313
                  %v315 = vld [vmem:[%s283 + $0x78] sm:%s276]
                  %316 = vst [vmem:[%s284 + $0x3c] sm:%s276] %v315
                $region63: #{tpu_custom_call.1} parent=50 // loop_footer
                  %s282 = sadd.s32 1, %s278
                $region64: #{tpu_custom_call.1} parent=50 // loop_footer_branch
                  %277 = sbr.rel target = $region60
                $region65: #{tpu_custom_call.1} parent=50 // loop_exit
                  _
              $region51: #{tpu_custom_call.1} parent=35 // pred_fallthru
                _
            $region36: #{tpu_custom_call.1} parent=31 // pred_fallthru
              _
            // Predicated region
            $region37: #{tpu_custom_call.1} parent=31 // pred_check
              _
            $region38: #{tpu_custom_call.1} parent=31 // pred_check_branch
              %222 = sbr.rel (0) target = $region40
            $region39: #{tpu_custom_call.1} parent=31 // pred_region
              %s224 = ssub.s32 16, 1
              loop: start=0, step=1, limit=1
              $region41: #{tpu_custom_call.1} parent=39 // loop_pre_header
                _
              $region42: #{tpu_custom_call.1} parent=39 // loop_header
                %s226 = sphi 0, %s230
                %p227 = scmp.ge.s32.totalorder %s226, 1
                %s231 = sphi %s216, %s216
                %s232 = sphi %s211, %s211
              $region43: #{tpu_custom_call.1} parent=39 // loop_header_branch
                %229 = sbr.rel (%p227) target = $region47
              $region44: #{tpu_custom_call.1} parent=39 // loop_body
                %v233 = vld [vmem:[%s231] sm:%s224]
                %234 = vst [vmem:[%s232] sm:%s224] %v233
                %v235 = vld [vmem:[%s231 + $0x8] sm:%s224]
                %236 = vst [vmem:[%s232 + $0x4] sm:%s224] %v235
                %v237 = vld [vmem:[%s231 + $0x10] sm:%s224]
                %238 = vst [vmem:[%s232 + $0x8] sm:%s224] %v237
                %v239 = vld [vmem:[%s231 + $0x18] sm:%s224]
                %240 = vst [vmem:[%s232 + $0xc] sm:%s224] %v239
                %v241 = vld [vmem:[%s231 + $0x20] sm:%s224]
                %242 = vst [vmem:[%s232 + $0x10] sm:%s224] %v241
                %v243 = vld [vmem:[%s231 + $0x28] sm:%s224]
                %244 = vst [vmem:[%s232 + $0x14] sm:%s224] %v243
                %v245 = vld [vmem:[%s231 + $0x30] sm:%s224]
                %246 = vst [vmem:[%s232 + $0x18] sm:%s224] %v245
                %v247 = vld [vmem:[%s231 + $0x38] sm:%s224]
                %248 = vst [vmem:[%s232 + $0x1c] sm:%s224] %v247
                %v249 = vld [vmem:[%s231 + $0x40] sm:%s224]
                %250 = vst [vmem:[%s232 + $0x20] sm:%s224] %v249
                %v251 = vld [vmem:[%s231 + $0x48] sm:%s224]
                %252 = vst [vmem:[%s232 + $0x24] sm:%s224] %v251
                %v253 = vld [vmem:[%s231 + $0x50] sm:%s224]
                %254 = vst [vmem:[%s232 + $0x28] sm:%s224] %v253
                %v255 = vld [vmem:[%s231 + $0x58] sm:%s224]
                %256 = vst [vmem:[%s232 + $0x2c] sm:%s224] %v255
                %v257 = vld [vmem:[%s231 + $0x60] sm:%s224]
                %258 = vst [vmem:[%s232 + $0x30] sm:%s224] %v257
                %v259 = vld [vmem:[%s231 + $0x68] sm:%s224]
                %260 = vst [vmem:[%s232 + $0x34] sm:%s224] %v259
                %v261 = vld [vmem:[%s231 + $0x70] sm:%s224]
                %262 = vst [vmem:[%s232 + $0x38] sm:%s224] %v261
                %v263 = vld [vmem:[%s231 + $0x78] sm:%s224]
                %264 = vst [vmem:[%s232 + $0x3c] sm:%s224] %v263
              $region45: #{tpu_custom_call.1} parent=39 // loop_footer
                %s230 = sadd.s32 1, %s226
              $region46: #{tpu_custom_call.1} parent=39 // loop_footer_branch
                %225 = sbr.rel target = $region42
              $region47: #{tpu_custom_call.1} parent=39 // loop_exit
                _
            $region40: #{tpu_custom_call.1} parent=31 // pred_fallthru
              _
          $region32: #{tpu_custom_call.1} parent=27 // pred_fallthru
            _
          %317 = vnop
        $region28: #{tpu_custom_call.1} parent=15 // pred_fallthru
          _
        // Predicated region
        $region66: #{tpu_custom_call.1} parent=15 // pred_check
          %p318 = pneg %p134
        $region67: #{tpu_custom_call.1} parent=15 // pred_check_branch
          %320 = sbr.rel (%p318) target = $region69
        $region68: #{tpu_custom_call.1} parent=15 // pred_region
          %s321 = smul.u32 16, %s22
          %p322 = scmp.lt.s32.totalorder %s321, 31
          %s323 = scalar_select %p322, %s321, 31
          %p324 = scmp.lt.s32.totalorder %s21, 0
          %s325 = scalar_select %p324, %s21, 0
          %s326 = sadd.s32 %s325, %s323
          %s327 = smul.addr %s326, 8
          %s328 = scalar_lea.vmem %s3, %s327
          %s329 = smul.u32 16, %s22
        $region69: #{tpu_custom_call.1} parent=15 // pred_fallthru
          _
      $region16: #{tpu_custom_call.1} parent=5 // pred_fallthru
        _
      %p330 = scmp.le.s32.totalorder 1, %s13
      %p331 = scmp.lt.s32.totalorder %s13, 5
      %p332 = pnand %p330, %p331
      %p333 = pneg %p332
      // Predicated region
      $region70: #{tpu_custom_call.1} parent=5 // pred_check
        _
      $region71: #{tpu_custom_call.1} parent=5 // pred_check_branch
        %335 = sbr.rel (%p332) target = $region73
      $region72: #{tpu_custom_call.1} parent=5 // pred_region
        %s336 = ssub.s32 %s13, 1
        %s337 = sand.u32 %s99, 1
        %s338 = sand.u32 %s99, 1
        %s339 = smul.addr %s338, 64
        %s340 = scalar_lea.vmem [#allocation3], %s339
        // Predicated region
        $region74: #{tpu_custom_call.1} parent=72 // pred_check
          %p341 = pneg %p112
        $region75: #{tpu_custom_call.1} parent=72 // pred_check_branch
          %343 = sbr.rel (%p341) target = $region77
        $region76: #{tpu_custom_call.1} parent=72 // pred_region
          _
        $region77: #{tpu_custom_call.1} parent=72 // pred_fallthru
          _
        %s344 = smul.u32 16, %s23
        %p345 = scmp.lt.s32.totalorder %s344, 31
        %s346 = scalar_select %p345, %s344, 31
        %s347 = smul.addr %s346, 8
        %s348 = scalar_lea.vmem %s0, %s347
        %p349 = pneg %p58
        %p350 = pneg %p55
        %s351 = smul.u32 16, %s25
        %p352 = scmp.lt.s32.totalorder %s351, 31
        %s353 = scalar_select %p352, %s351, 31
        %s354 = smul.addr %s353, 8
        %s355 = scalar_lea.vmem %s1, %s354
        %p356 = pneg %p84
        %p357 = pneg %p81
        %s358 = sand.u32 %s99, 1
        %s359 = sand.u32 %s99, 1
        %s360 = smul.addr %s359, 64
        %s361 = scalar_lea.vmem [#allocation3], %s360
        %p362 = pneg %p112
        %p363 = pneg %p109
        %s364 = smul.u32 16, %s25
        %p365 = scmp.lt.s32.totalorder %s364, 31
        %s366 = scalar_select %p365, %s364, 31
        %p367 = scmp.lt.s32.totalorder %s24, 0
        %s368 = scalar_select %p367, %s24, 0
        %s369 = sadd.s32 %s368, %s366
        %s370 = smul.addr %s369, 8
        %s371 = scalar_lea.vmem %s3, %s370
        %p372 = pneg %p140
        %p373 = pneg %p137
        %p374 = pneg %p168
        %p375 = pneg %p165
        %s376 = sand.u32 %s155, 1
        %s377 = scalar_lea.sflag [#allocation5], %s376
        %s378 = sand.u32 %s155, 1
        %s379 = smul.addr %s378, 128
        %s380 = scalar_lea.vmem [#allocation4], %s379
        %s381 = smul.u32 16, %s23
        %p382 = scmp.lt.s32.totalorder %s381, 31
        %s383 = scalar_select %p382, %s381, 31
        %s384 = smul.addr %s383, 8
        %s385 = scalar_lea.vmem %s0, %s384
        %s386 = smul.u32 16, %s23
        %s387 = smul.u32 16, %s25
        %p388 = scmp.lt.s32.totalorder %s387, 31
        %s389 = scalar_select %p388, %s387, 31
        %s390 = smul.addr %s389, 8
        %s391 = scalar_lea.vmem %s1, %s390
        %s392 = smul.u32 16, %s25
        %s393 = smul.u32 16, %s23
        %s394 = smul.u32 16, %s25
        %p395 = scmp.lt.s32.totalorder %s394, 31
        %s396 = scalar_select %p395, %s394, 31
        %p397 = scmp.lt.s32.totalorder %s24, 0
        %s398 = scalar_select %p397, %s24, 0
        %s399 = sadd.s32 %s398, %s396
        %s400 = smul.addr %s399, 8
        %s401 = scalar_lea.vmem %s3, %s400
        %s402 = smul.u32 16, %s25
        %s403 = smul.u32 16, %s23
        %p404 = scmp.eq.s32.totalorder %s25, 0
        // Predicated region
        $region78: #{tpu_custom_call.1} parent=72 // pred_check
          %p405 = pneg %p404
        $region79: #{tpu_custom_call.1} parent=72 // pred_check_branch
          %407 = sbr.rel (%p405) target = $region81
        $region80: #{tpu_custom_call.1} parent=72 // pred_region
          %408 = vst [vmem:[#allocation2] sm:$0xff] 0.0
          %409 = vst [vmem:[#allocation2 + $0x8] sm:$0xff] 0.0
          %410 = vst [vmem:[#allocation2 + $0x10] sm:$0xff] 0.0
          %411 = vst [vmem:[#allocation2 + $0x18] sm:$0xff] 0.0
          %412 = vst [vmem:[#allocation2 + $0x20] sm:$0xff] 0.0
          %413 = vst [vmem:[#allocation2 + $0x28] sm:$0xff] 0.0
          %414 = vst [vmem:[#allocation2 + $0x30] sm:$0xff] 0.0
          %415 = vst [vmem:[#allocation2 + $0x38] sm:$0xff] 0.0
          %416 = vst [vmem:[#allocation2 + $0x40] sm:$0xff] 0.0
          %417 = vst [vmem:[#allocation2 + $0x48] sm:$0xff] 0.0
          %418 = vst [vmem:[#allocation2 + $0x50] sm:$0xff] 0.0
          %419 = vst [vmem:[#allocation2 + $0x58] sm:$0xff] 0.0
          %420 = vst [vmem:[#allocation2 + $0x60] sm:$0xff] 0.0
          %421 = vst [vmem:[#allocation2 + $0x68] sm:$0xff] 0.0
          %422 = vst [vmem:[#allocation2 + $0x70] sm:$0xff] 0.0
          %423 = vst [vmem:[#allocation2 + $0x78] sm:$0xff] 0.0
        $region81: #{tpu_custom_call.1} parent=72 // pred_fallthru
          _
        %v424 = vld [vmem:[%s340] sm:$0xf]
        %v425 = vld [vmem:[%s340 + $0x4] sm:$0xf]
        %v426 = vld [vmem:[%s340 + $0x8] sm:$0xf]
        %v427 = vld [vmem:[%s340 + $0xc] sm:$0xf]
        %v428 = vld [vmem:[%s340 + $0x10] sm:$0xf]
        %v429 = vld [vmem:[%s340 + $0x14] sm:$0xf]
        %v430 = vld [vmem:[%s340 + $0x18] sm:$0xf]
        %v431 = vld [vmem:[%s340 + $0x1c] sm:$0xf]
        %v432 = vld [vmem:[%s340 + $0x20] sm:$0xf]
        %v433 = vld [vmem:[%s340 + $0x24] sm:$0xf]
        %v434 = vld [vmem:[%s340 + $0x28] sm:$0xf]
        %v435 = vld [vmem:[%s340 + $0x2c] sm:$0xf]
        %v436 = vld [vmem:[%s340 + $0x30] sm:$0xf]
        %v437 = vld [vmem:[%s340 + $0x34] sm:$0xf]
        %v438 = vld [vmem:[%s340 + $0x38] sm:$0xf]
        %v439 = vld [vmem:[%s340 + $0x3c] sm:$0xf]
        %v440 = vunpack.c.l.bf16 %v424
        %v441 = vunpack.c.l.bf16 %v425
        %v442 = vunpack.c.l.bf16 %v426
        %v443 = vunpack.c.l.bf16 %v427
        %v444 = vunpack.c.l.bf16 %v428
        %v445 = vunpack.c.l.bf16 %v429
        %v446 = vunpack.c.l.bf16 %v430
        %v447 = vunpack.c.l.bf16 %v431
        %v448 = vunpack.c.l.bf16 %v432
        %v449 = vunpack.c.l.bf16 %v433
        %v450 = vunpack.c.l.bf16 %v434
        %v451 = vunpack.c.l.bf16 %v435
        %v452 = vunpack.c.l.bf16 %v436
        %v453 = vunpack.c.l.bf16 %v437
        %v454 = vunpack.c.l.bf16 %v438
        %v455 = vunpack.c.l.bf16 %v439
        %v456 = vld [vmem:[%s401] sm:$0xff]
        %v457 = vld [vmem:[%s401 + $0x8] sm:$0xff]
        %v458 = vld [vmem:[%s401 + $0x10] sm:$0xff]
        %v459 = vld [vmem:[%s401 + $0x18] sm:$0xff]
        %v460 = vld [vmem:[%s401 + $0x20] sm:$0xff]
        %v461 = vld [vmem:[%s401 + $0x28] sm:$0xff]
        %v462 = vld [vmem:[%s401 + $0x30] sm:$0xff]
        %v463 = vld [vmem:[%s401 + $0x38] sm:$0xff]
        %v464 = vld [vmem:[%s401 + $0x40] sm:$0xff]
        %v465 = vld [vmem:[%s401 + $0x48] sm:$0xff]
        %v466 = vld [vmem:[%s401 + $0x50] sm:$0xff]
        %v467 = vld [vmem:[%s401 + $0x58] sm:$0xff]
        %v468 = vld [vmem:[%s401 + $0x60] sm:$0xff]
        %v469 = vld [vmem:[%s401 + $0x68] sm:$0xff]
        %v470 = vld [vmem:[%s401 + $0x70] sm:$0xff]
        %v471 = vld [vmem:[%s401 + $0x78] sm:$0xff]
        %v472 = vld [vmem:[%s391] sm:$0xff]
        %v473 = vld [vmem:[%s391 + $0x8] sm:$0xff]
        %v474 = vld [vmem:[%s391 + $0x10] sm:$0xff]
        %v475 = vld [vmem:[%s391 + $0x18] sm:$0xff]
        %v476 = vld [vmem:[%s391 + $0x20] sm:$0xff]
        %v477 = vld [vmem:[%s391 + $0x28] sm:$0xff]
        %v478 = vld [vmem:[%s391 + $0x30] sm:$0xff]
        %v479 = vld [vmem:[%s391 + $0x38] sm:$0xff]
        %v480 = vld [vmem:[%s391 + $0x40] sm:$0xff]
        %v481 = vld [vmem:[%s391 + $0x48] sm:$0xff]
        %v482 = vld [vmem:[%s391 + $0x50] sm:$0xff]
        %v483 = vld [vmem:[%s391 + $0x58] sm:$0xff]
        %v484 = vld [vmem:[%s391 + $0x60] sm:$0xff]
        %v485 = vld [vmem:[%s391 + $0x68] sm:$0xff]
        %v486 = vld [vmem:[%s391 + $0x70] sm:$0xff]
        %v487 = vld [vmem:[%s391 + $0x78] sm:$0xff]
        %489 = vset.pattern.permute.xlu0 0
        %490 = vperm.xlu0 %489, %v472
        %v491 = vpop.permute.xlu0 %490
        %494 = vset.pattern.permute.xlu0 0
        %495 = vperm.xlu0 %494, %v473
        %v496 = vpop.permute.xlu0 %495
        %499 = vset.pattern.permute.xlu0 0
        %500 = vperm.xlu0 %499, %v474
        %v501 = vpop.permute.xlu0 %500
        %504 = vset.pattern.permute.xlu0 0
        %505 = vperm.xlu0 %504, %v475
        %v506 = vpop.permute.xlu0 %505
        %509 = vset.pattern.permute.xlu0 0
        %510 = vperm.xlu0 %509, %v476
        %v511 = vpop.permute.xlu0 %510
        %514 = vset.pattern.permute.xlu0 0
        %515 = vperm.xlu0 %514, %v477
        %v516 = vpop.permute.xlu0 %515
        %519 = vset.pattern.permute.xlu0 0
        %520 = vperm.xlu0 %519, %v478
        %v521 = vpop.permute.xlu0 %520
        %524 = vset.pattern.permute.xlu0 0
        %525 = vperm.xlu0 %524, %v479
        %v526 = vpop.permute.xlu0 %525
        %529 = vset.pattern.permute.xlu0 0
        %530 = vperm.xlu0 %529, %v480
        %v531 = vpop.permute.xlu0 %530
        %534 = vset.pattern.permute.xlu0 0
        %535 = vperm.xlu0 %534, %v481
        %v536 = vpop.permute.xlu0 %535
        %539 = vset.pattern.permute.xlu0 0
        %540 = vperm.xlu0 %539, %v482
        %v541 = vpop.permute.xlu0 %540
        %544 = vset.pattern.permute.xlu0 0
        %545 = vperm.xlu0 %544, %v483
        %v546 = vpop.permute.xlu0 %545
        %549 = vset.pattern.permute.xlu0 0
        %550 = vperm.xlu0 %549, %v484
        %v551 = vpop.permute.xlu0 %550
        %554 = vset.pattern.permute.xlu0 0
        %555 = vperm.xlu0 %554, %v485
        %v556 = vpop.permute.xlu0 %555
        %559 = vset.pattern.permute.xlu0 0
        %560 = vperm.xlu0 %559, %v486
        %v561 = vpop.permute.xlu0 %560
        %564 = vset.pattern.permute.xlu0 0
        %565 = vperm.xlu0 %564, %v487
        %v566 = vpop.permute.xlu0 %565
        %v568 = vmul.f32 %v456, %v491
        %v569 = vmul.f32 %v457, %v496
        %v570 = vmul.f32 %v458, %v501
        %v571 = vmul.f32 %v459, %v506
        %v572 = vmul.f32 %v460, %v511
        %v573 = vmul.f32 %v461, %v516
        %v574 = vmul.f32 %v462, %v521
        %v575 = vmul.f32 %v463, %v526
        %v576 = vmul.f32 %v464, %v531
        %v577 = vmul.f32 %v465, %v536
        %v578 = vmul.f32 %v466, %v541
        %v579 = vmul.f32 %v467, %v546
        %v580 = vmul.f32 %v468, %v551
        %v581 = vmul.f32 %v469, %v556
        %v582 = vmul.f32 %v470, %v561
        %v583 = vmul.f32 %v471, %v566
        %v584 = vld [vmem:[#allocation2] sm:$0xff]
        %v585 = vld [vmem:[#allocation2 + $0x8] sm:$0xff]
        %v586 = vld [vmem:[#allocation2 + $0x10] sm:$0xff]
        %v587 = vld [vmem:[#allocation2 + $0x18] sm:$0xff]
        %v588 = vld [vmem:[#allocation2 + $0x20] sm:$0xff]
        %v589 = vld [vmem:[#allocation2 + $0x28] sm:$0xff]
        %v590 = vld [vmem:[#allocation2 + $0x30] sm:$0xff]
        %v591 = vld [vmem:[#allocation2 + $0x38] sm:$0xff]
        %v592 = vld [vmem:[#allocation2 + $0x40] sm:$0xff]
        %v593 = vld [vmem:[#allocation2 + $0x48] sm:$0xff]
        %v594 = vld [vmem:[#allocation2 + $0x50] sm:$0xff]
        %v595 = vld [vmem:[#allocation2 + $0x58] sm:$0xff]
        %v596 = vld [vmem:[#allocation2 + $0x60] sm:$0xff]
        %v597 = vld [vmem:[#allocation2 + $0x68] sm:$0xff]
        %v598 = vld [vmem:[#allocation2 + $0x70] sm:$0xff]
        %v599 = vld [vmem:[#allocation2 + $0x78] sm:$0xff]
        %600 = vmatprep.subr.mxu0 0.0
        %601 = vmatpush1.msra.mxu0 %v583
        %602 = vmatprep.subr.mxu0 0.0
        %603 = vmatpush1.msra.mxu0 %v582
        %604 = vmatprep.subr.mxu0 0.0
        %605 = vmatpush1.msra.mxu0 %v581
        %606 = vmatprep.subr.mxu0 0.0
        %607 = vmatpush1.msra.mxu0 %v580
        %608 = vmatprep.subr.mxu0 0.0
        %609 = vmatpush1.msra.mxu0 %v579
        %610 = vmatprep.subr.mxu0 0.0
        %611 = vmatpush1.msra.mxu0 %v578
        %612 = vmatprep.subr.mxu0 0.0
        %613 = vmatpush1.msra.mxu0 %v577
        %614 = vmatprep.subr.mxu0 0.0
        %615 = vmatpush1.msra.mxu0 %v576
        %616 = vmatprep.subr.mxu0 0.0
        %617 = vmatpush1.msra.mxu0 %v575
        %618 = vmatprep.subr.mxu0 0.0
        %619 = vmatpush1.msra.mxu0 %v574
        %620 = vmatprep.subr.mxu0 0.0
        %621 = vmatpush1.msra.mxu0 %v573
        %622 = vmatprep.subr.mxu0 0.0
        %623 = vmatpush1.msra.mxu0 %v572
        %624 = vmatprep.subr.mxu0 0.0
        %625 = vmatpush1.msra.mxu0 %v571
        %626 = vmatprep.subr.mxu0 0.0
        %627 = vmatpush1.msra.mxu0 %v570
        %628 = vmatprep.subr.mxu0 0.0
        %629 = vmatpush1.msra.mxu0 %v569
        %630 = vmatprep.subr.mxu0 0.0
        %631 = vmatpush1.msra.mxu0 %v568
        %632 = vmatprep.subr.mxu0 0.0
        %633 = vmatpush2.msra.mxu0 0.0
        %634 = vmatprep.subr.mxu0 0.0
        %635 = vmatpush2.msra.mxu0 0.0
        %636 = vmatprep.subr.mxu0 0.0
        %637 = vmatpush2.msra.mxu0 0.0
        %638 = vmatprep.subr.mxu0 0.0
        %639 = vmatpush2.msra.mxu0 0.0
        %640 = vmatprep.subr.mxu0 0.0
        %641 = vmatpush2.msra.mxu0 0.0
        %642 = vmatprep.subr.mxu0 0.0
        %643 = vmatpush2.msra.mxu0 0.0
        %644 = vmatprep.subr.mxu0 0.0
        %645 = vmatpush2.msra.mxu0 0.0
        %646 = vmatprep.subr.mxu0 0.0
        %647 = vmatpush2.msra.mxu0 0.0
        %648 = vmatprep.subr.mxu0 0.0
        %649 = vmatpush2.msra.mxu0 0.0
        %650 = vmatprep.subr.mxu0 0.0
        %651 = vmatpush2.msra.mxu0 0.0
        %652 = vmatprep.subr.mxu0 0.0
        %653 = vmatpush2.msra.mxu0 0.0
        %654 = vmatprep.subr.mxu0 0.0
        %655 = vmatpush2.msra.mxu0 0.0
        %656 = vmatprep.subr.mxu0 0.0
        %657 = vmatpush2.msra.mxu0 0.0
        %658 = vmatprep.subr.mxu0 0.0
        %659 = vmatpush2.msra.mxu0 0.0
        %660 = vmatprep.subr.mxu0 0.0
        %661 = vmatpush2.msra.mxu0 0.0
        %662 = vmatprep.subr.mxu0 0.0
        %663 = vmatpush2.msra.mxu0 0.0
        %664 = vmatprep.mubr.f32.mxu0 0.0
        %665 = vmatmul.mubr.f32.gmra.mxu0 %v440
        %v666 = vpop.f32.mrf.mxu0
        %v667 = vadd.f32 0.0, %v666
        %v668 = vpop.f32.mrf.mxu0
        %669 = vmatprep.mubr.f32.mxu0 0.0
        %670 = vmatmul.mubr.f32.gmra.mxu0 %v441
        %v671 = vpop.f32.mrf.mxu0
        %v672 = vadd.f32 0.0, %v671
        %v673 = vpop.f32.mrf.mxu0
        %674 = vmatprep.mubr.f32.mxu0 0.0
        %675 = vmatmul.mubr.f32.gmra.mxu0 %v442
        %v676 = vpop.f32.mrf.mxu0
        %v677 = vadd.f32 0.0, %v676
        %v678 = vpop.f32.mrf.mxu0
        %679 = vmatprep.mubr.f32.mxu0 0.0
        %680 = vmatmul.mubr.f32.gmra.mxu0 %v443
        %v681 = vpop.f32.mrf.mxu0
        %v682 = vadd.f32 0.0, %v681
        %v683 = vpop.f32.mrf.mxu0
        %684 = vmatprep.mubr.f32.mxu0 0.0
        %685 = vmatmul.mubr.f32.gmra.mxu0 %v444
        %v686 = vpop.f32.mrf.mxu0
        %v687 = vadd.f32 0.0, %v686
        %v688 = vpop.f32.mrf.mxu0
        %689 = vmatprep.mubr.f32.mxu0 0.0
        %690 = vmatmul.mubr.f32.gmra.mxu0 %v445
        %v691 = vpop.f32.mrf.mxu0
        %v692 = vadd.f32 0.0, %v691
        %v693 = vpop.f32.mrf.mxu0
        %694 = vmatprep.mubr.f32.mxu0 0.0
        %695 = vmatmul.mubr.f32.gmra.mxu0 %v446
        %v696 = vpop.f32.mrf.mxu0
        %v697 = vadd.f32 0.0, %v696
        %v698 = vpop.f32.mrf.mxu0
        %699 = vmatprep.mubr.f32.mxu0 0.0
        %700 = vmatmul.mubr.f32.gmra.mxu0 %v447
        %v701 = vpop.f32.mrf.mxu0
        %v702 = vadd.f32 0.0, %v701
        %v703 = vpop.f32.mrf.mxu0
        %704 = vmatprep.mubr.f32.mxu0 0.0
        %705 = vmatmul.mubr.f32.gmra.mxu0 %v448
        %v706 = vpop.f32.mrf.mxu0
        %v707 = vadd.f32 0.0, %v706
        %v708 = vpop.f32.mrf.mxu0
        %709 = vmatprep.mubr.f32.mxu0 0.0
        %710 = vmatmul.mubr.f32.gmra.mxu0 %v449
        %v711 = vpop.f32.mrf.mxu0
        %v712 = vadd.f32 0.0, %v711
        %v713 = vpop.f32.mrf.mxu0
        %714 = vmatprep.mubr.f32.mxu0 0.0
        %715 = vmatmul.mubr.f32.gmra.mxu0 %v450
        %v716 = vpop.f32.mrf.mxu0
        %v717 = vadd.f32 0.0, %v716
        %v718 = vpop.f32.mrf.mxu0
        %719 = vmatprep.mubr.f32.mxu0 0.0
        %720 = vmatmul.mubr.f32.gmra.mxu0 %v451
        %v721 = vpop.f32.mrf.mxu0
        %v722 = vadd.f32 0.0, %v721
        %v723 = vpop.f32.mrf.mxu0
        %724 = vmatprep.mubr.f32.mxu0 0.0
        %725 = vmatmul.mubr.f32.gmra.mxu0 %v452
        %v726 = vpop.f32.mrf.mxu0
        %v727 = vadd.f32 0.0, %v726
        %v728 = vpop.f32.mrf.mxu0
        %729 = vmatprep.mubr.f32.mxu0 0.0
        %730 = vmatmul.mubr.f32.gmra.mxu0 %v453
        %v731 = vpop.f32.mrf.mxu0
        %v732 = vadd.f32 0.0, %v731
        %v733 = vpop.f32.mrf.mxu0
        %734 = vmatprep.mubr.f32.mxu0 0.0
        %735 = vmatmul.mubr.f32.gmra.mxu0 %v454
        %v736 = vpop.f32.mrf.mxu0
        %v737 = vadd.f32 0.0, %v736
        %v738 = vpop.f32.mrf.mxu0
        %739 = vmatprep.mubr.f32.mxu0 0.0
        %740 = vmatmul.mubr.f32.gmra.mxu0 %v455
        %v741 = vpop.f32.mrf.mxu0
        %v742 = vadd.f32 0.0, %v741
        %v743 = vpop.f32.mrf.mxu0
        %744 = vdwg.mxu0
        %v745 = vadd.f32 %v584, %v667
        %v746 = vadd.f32 %v585, %v672
        %v747 = vadd.f32 %v586, %v677
        %v748 = vadd.f32 %v587, %v682
        %v749 = vadd.f32 %v588, %v687
        %v750 = vadd.f32 %v589, %v692
        %v751 = vadd.f32 %v590, %v697
        %v752 = vadd.f32 %v591, %v702
        %v753 = vadd.f32 %v592, %v707
        %v754 = vadd.f32 %v593, %v712
        %v755 = vadd.f32 %v594, %v717
        %v756 = vadd.f32 %v595, %v722
        %v757 = vadd.f32 %v596, %v727
        %v758 = vadd.f32 %v597, %v732
        %v759 = vadd.f32 %v598, %v737
        %v760 = vadd.f32 %v599, %v742
        %761 = vst [vmem:[#allocation2] sm:$0xff] %v745
        %762 = vst [vmem:[#allocation2 + $0x8] sm:$0xff] %v746
        %763 = vst [vmem:[#allocation2 + $0x10] sm:$0xff] %v747
        %764 = vst [vmem:[#allocation2 + $0x18] sm:$0xff] %v748
        %765 = vst [vmem:[#allocation2 + $0x20] sm:$0xff] %v749
        %766 = vst [vmem:[#allocation2 + $0x28] sm:$0xff] %v750
        %767 = vst [vmem:[#allocation2 + $0x30] sm:$0xff] %v751
        %768 = vst [vmem:[#allocation2 + $0x38] sm:$0xff] %v752
        %769 = vst [vmem:[#allocation2 + $0x40] sm:$0xff] %v753
        %770 = vst [vmem:[#allocation2 + $0x48] sm:$0xff] %v754
        %771 = vst [vmem:[#allocation2 + $0x50] sm:$0xff] %v755
        %772 = vst [vmem:[#allocation2 + $0x58] sm:$0xff] %v756
        %773 = vst [vmem:[#allocation2 + $0x60] sm:$0xff] %v757
        %774 = vst [vmem:[#allocation2 + $0x68] sm:$0xff] %v758
        %775 = vst [vmem:[#allocation2 + $0x70] sm:$0xff] %v759
        %776 = vst [vmem:[#allocation2 + $0x78] sm:$0xff] %v760
        %p777 = scmp.eq.s32.totalorder %s25, 1
        // Predicated region
        $region82: #{tpu_custom_call.1} parent=72 // pred_check
          %p778 = pneg %p777
        $region83: #{tpu_custom_call.1} parent=72 // pred_check_branch
          %780 = sbr.rel (%p778) target = $region85
        $region84: #{tpu_custom_call.1} parent=72 // pred_region
          %v781 = vld [vmem:[#allocation2] sm:$0xff]
          %v782 = vld [vmem:[#allocation2 + $0x8] sm:$0xff]
          %v783 = vld [vmem:[#allocation2 + $0x10] sm:$0xff]
          %v784 = vld [vmem:[#allocation2 + $0x18] sm:$0xff]
          %v785 = vld [vmem:[#allocation2 + $0x20] sm:$0xff]
          %v786 = vld [vmem:[#allocation2 + $0x28] sm:$0xff]
          %v787 = vld [vmem:[#allocation2 + $0x30] sm:$0xff]
          %v788 = vld [vmem:[#allocation2 + $0x38] sm:$0xff]
          %v789 = vld [vmem:[#allocation2 + $0x40] sm:$0xff]
          %v790 = vld [vmem:[#allocation2 + $0x48] sm:$0xff]
          %v791 = vld [vmem:[#allocation2 + $0x50] sm:$0xff]
          %v792 = vld [vmem:[#allocation2 + $0x58] sm:$0xff]
          %v793 = vld [vmem:[#allocation2 + $0x60] sm:$0xff]
          %v794 = vld [vmem:[#allocation2 + $0x68] sm:$0xff]
          %v795 = vld [vmem:[#allocation2 + $0x70] sm:$0xff]
          %v796 = vld [vmem:[#allocation2 + $0x78] sm:$0xff]
          %v797 = vld [vmem:[%s385] sm:$0xff]
          %v798 = vld [vmem:[%s385 + $0x8] sm:$0xff]
          %v799 = vld [vmem:[%s385 + $0x10] sm:$0xff]
          %v800 = vld [vmem:[%s385 + $0x18] sm:$0xff]
          %v801 = vld [vmem:[%s385 + $0x20] sm:$0xff]
          %v802 = vld [vmem:[%s385 + $0x28] sm:$0xff]
          %v803 = vld [vmem:[%s385 + $0x30] sm:$0xff]
          %v804 = vld [vmem:[%s385 + $0x38] sm:$0xff]
          %v805 = vld [vmem:[%s385 + $0x40] sm:$0xff]
          %v806 = vld [vmem:[%s385 + $0x48] sm:$0xff]
          %v807 = vld [vmem:[%s385 + $0x50] sm:$0xff]
          %v808 = vld [vmem:[%s385 + $0x58] sm:$0xff]
          %v809 = vld [vmem:[%s385 + $0x60] sm:$0xff]
          %v810 = vld [vmem:[%s385 + $0x68] sm:$0xff]
          %v811 = vld [vmem:[%s385 + $0x70] sm:$0xff]
          %v812 = vld [vmem:[%s385 + $0x78] sm:$0xff]
          %814 = vset.pattern.permute.xlu0 0
          %815 = vperm.xlu0 %814, %v797
          %v816 = vpop.permute.xlu0 %815
          %819 = vset.pattern.permute.xlu0 0
          %820 = vperm.xlu0 %819, %v798
          %v821 = vpop.permute.xlu0 %820
          %824 = vset.pattern.permute.xlu0 0
          %825 = vperm.xlu0 %824, %v799
          %v826 = vpop.permute.xlu0 %825
          %829 = vset.pattern.permute.xlu0 0
          %830 = vperm.xlu0 %829, %v800
          %v831 = vpop.permute.xlu0 %830
          %834 = vset.pattern.permute.xlu0 0
          %835 = vperm.xlu0 %834, %v801
          %v836 = vpop.permute.xlu0 %835
          %839 = vset.pattern.permute.xlu0 0
          %840 = vperm.xlu0 %839, %v802
          %v841 = vpop.permute.xlu0 %840
          %844 = vset.pattern.permute.xlu0 0
          %845 = vperm.xlu0 %844, %v803
          %v846 = vpop.permute.xlu0 %845
          %849 = vset.pattern.permute.xlu0 0
          %850 = vperm.xlu0 %849, %v804
          %v851 = vpop.permute.xlu0 %850
          %854 = vset.pattern.permute.xlu0 0
          %855 = vperm.xlu0 %854, %v805
          %v856 = vpop.permute.xlu0 %855
          %859 = vset.pattern.permute.xlu0 0
          %860 = vperm.xlu0 %859, %v806
          %v861 = vpop.permute.xlu0 %860
          %864 = vset.pattern.permute.xlu0 0
          %865 = vperm.xlu0 %864, %v807
          %v866 = vpop.permute.xlu0 %865
          %869 = vset.pattern.permute.xlu0 0
          %870 = vperm.xlu0 %869, %v808
          %v871 = vpop.permute.xlu0 %870
          %874 = vset.pattern.permute.xlu0 0
          %875 = vperm.xlu0 %874, %v809
          %v876 = vpop.permute.xlu0 %875
          %879 = vset.pattern.permute.xlu0 0
          %880 = vperm.xlu0 %879, %v810
          %v881 = vpop.permute.xlu0 %880
          %884 = vset.pattern.permute.xlu0 0
          %885 = vperm.xlu0 %884, %v811
          %v886 = vpop.permute.xlu0 %885
          %889 = vset.pattern.permute.xlu0 0
          %890 = vperm.xlu0 %889, %v812
          %v891 = vpop.permute.xlu0 %890
          %v893 = vmul.f32 %v781, %v816
          %v894 = vmul.f32 %v782, %v821
          %v895 = vmul.f32 %v783, %v826
          %v896 = vmul.f32 %v784, %v831
          %v897 = vmul.f32 %v785, %v836
          %v898 = vmul.f32 %v786, %v841
          %v899 = vmul.f32 %v787, %v846
          %v900 = vmul.f32 %v788, %v851
          %v901 = vmul.f32 %v789, %v856
          %v902 = vmul.f32 %v790, %v861
          %v903 = vmul.f32 %v791, %v866
          %v904 = vmul.f32 %v792, %v871
          %v905 = vmul.f32 %v793, %v876
          %v906 = vmul.f32 %v794, %v881
          %v907 = vmul.f32 %v795, %v886
          %v908 = vmul.f32 %v796, %v891
          %909 = vst [vmem:[%s380] sm:$0xff] %v893
          %910 = vst [vmem:[%s380 + $0x8] sm:$0xff] %v894
          %911 = vst [vmem:[%s380 + $0x10] sm:$0xff] %v895
          %912 = vst [vmem:[%s380 + $0x18] sm:$0xff] %v896
          %913 = vst [vmem:[%s380 + $0x20] sm:$0xff] %v897
          %914 = vst [vmem:[%s380 + $0x28] sm:$0xff] %v898
          %915 = vst [vmem:[%s380 + $0x30] sm:$0xff] %v899
          %916 = vst [vmem:[%s380 + $0x38] sm:$0xff] %v900
          %917 = vst [vmem:[%s380 + $0x40] sm:$0xff] %v901
          %918 = vst [vmem:[%s380 + $0x48] sm:$0xff] %v902
          %919 = vst [vmem:[%s380 + $0x50] sm:$0xff] %v903
          %920 = vst [vmem:[%s380 + $0x58] sm:$0xff] %v904
          %921 = vst [vmem:[%s380 + $0x60] sm:$0xff] %v905
          %922 = vst [vmem:[%s380 + $0x68] sm:$0xff] %v906
          %923 = vst [vmem:[%s380 + $0x70] sm:$0xff] %v907
          %924 = vst [vmem:[%s380 + $0x78] sm:$0xff] %v908
        $region85: #{tpu_custom_call.1} parent=72 // pred_fallthru
          _
        %s925 = sand.u32 %s155, 1
        %s926 = scalar_lea.sflag [#allocation5], %s925
        %s927 = sand.u32 %s155, 1
        %s928 = smul.addr %s927, 128
        %s929 = scalar_lea.vmem [#allocation4], %s928
        // Predicated region
        $region86: #{tpu_custom_call.1} parent=72 // pred_check
          %p930 = pneg %p165
        $region87: #{tpu_custom_call.1} parent=72 // pred_check_branch
          %932 = sbr.rel (%p930) target = $region89
        $region88: #{tpu_custom_call.1} parent=72 // pred_region
          %s933 = smul.u32 16, %s23
          %s935 = ssub.s32 2048, 2048
          %936 = vsyncadd %s926, %s935
          %s937 = sadd.s32 %s24, %s933
          %s938 = smul.addr %s937, 128
          %s939 = scalar_lea.hbm %s4, %s938
          %s940 = sshll.u32 %s929, 4
          %s941 = int_to_ptr.vmem [resolvable:$true] %s940
          %946 = dma.vmem_to_hbm [thread:$0]  %s941, 2048, %s939, %s926, 128, 128, 8
        $region89: #{tpu_custom_call.1} parent=72 // pred_fallthru
          _
      $region73: #{tpu_custom_call.1} parent=5 // pred_fallthru
        _
      %p947 = scmp.le.s32.totalorder 2, %s13
      // Predicated region
      $region90: #{tpu_custom_call.1} parent=5 // pred_check
        %p948 = pneg %p947
      $region91: #{tpu_custom_call.1} parent=5 // pred_check_branch
        %950 = sbr.rel (%p948) target = $region93
      $region92: #{tpu_custom_call.1} parent=5 // pred_region
        %s951 = ssub.s32 %s13, 2
        // Predicated region
        $region94: #{tpu_custom_call.1} parent=92 // pred_check
          %p952 = pneg %p171
        $region95: #{tpu_custom_call.1} parent=92 // pred_check_branch
          %954 = sbr.rel (%p952) target = $region97
        $region96: #{tpu_custom_call.1} parent=92 // pred_region
          %s955 = sand.u32 %s156, 1
          %s956 = scalar_lea.sflag [#allocation5], %s955
          %s957 = sand.u32 %s156, 1
          %s958 = smul.addr %s957, 128
          %s959 = scalar_lea.vmem [#allocation4], %s958
          %960 = dma.done %s956, 2048
        $region97: #{tpu_custom_call.1} parent=92 // pred_fallthru
          _
      $region93: #{tpu_custom_call.1} parent=5 // pred_fallthru
        _
    $region6: #{tpu_custom_call.1} parent=1 // loop_footer
      %s17 = sadd.s32 1, %s13
    $region7: #{tpu_custom_call.1} parent=1 // loop_footer_branch
      %12 = sbr.rel target = $region3
    $region8: #{tpu_custom_call.1} parent=1 // loop_exit
      _
    %961 = vsyncpa [#allocation5], 1
    %s962 = scalar_lea.sflag [#allocation5], 1
    %963 = vsyncpa %s962, 1

</llo_original>
